<compile_context>
chip_gen: v7x
topology: tpu7x:2x2x1
jax: 0.10.0
libtpu: 0.0.40
codegen_flags: <defaults>
</compile_context>

<pallas_src>
import math

import jax
import jax.numpy as jnp
from jax.experimental import pallas as pl
from jax.experimental.pallas import tpu as pltpu


def _round_up(x: int, m: int) -> int:
    return (x + m - 1) // m * m


def _standard_normal(shape):
    """Standard-normal samples from the TPU hardware PRNG (prng_seed first)."""
    if hasattr(pltpu, "stateful_normal"):
        return pltpu.stateful_normal(shape, jnp.float32)

    # Paired Box-Muller fallback: one (log, sqrt, cos/sin) pair yields TWO
    # samples, halving PRNG bits and EUP transcendentals per element.
    def draw(s):
        b1 = pltpu.prng_random_bits(s)
        b2 = pltpu.prng_random_bits(s)
        u1 = ((b1 & 0xFFFFFF).astype(jnp.float32) + 1.0) * (1.0 / (1 << 24))  # (0,1]
        u2 = (b2 & 0xFFFFFF).astype(jnp.float32) * (1.0 / (1 << 24))          # [0,1)
        r = jnp.sqrt(-2.0 * jnp.log(u1))
        t = (2.0 * math.pi) * u2
        return r, t

    if shape[-1] % 2 == 0:
        half = shape[:-1] + (shape[-1] // 2,)
        r, t = draw(half)
        return jnp.concatenate([r * jnp.cos(t), r * jnp.sin(t)], axis=-1)
    r, t = draw(shape)
    return r * jnp.cos(t)


def _translate_kernel_hwprng(seed_ref, sigma_ref, pts_ref, out_ref):
    # (seed, tile_index) given as two independent seed words -> the HW PRNG
    # folds them, avoiding linearly-related per-tile streams.  Result is
    # deterministic per (seed, tiling) regardless of which TensorCore runs
    # the grid step.
    pltpu.prng_seed(seed_ref[0], pl.program_id(0))
    noise = _standard_normal(out_ref.shape)              # f32 N(0,1) in VMEM/vregs
    x = pts_ref[...].astype(jnp.float32)
    out_ref[...] = (x + sigma_ref[0] * noise).astype(out_ref.dtype)


def _translate_kernel_addnoise(sigma_ref, pts_ref, noise_ref, out_ref):
    # Portable path (non-TPU backends / interpret): noise is a regular input.
    x = pts_ref[...].astype(jnp.float32)
    out_ref[...] = (x + sigma_ref[0] * noise_ref[...]).astype(out_ref.dtype)


def random_translate_3d(point_set, sigma, seed, *, tile_lanes=None,
                        max_block_bytes=2 * 1024 * 1024):
    """RandomTranslate3d forward: point_set + N(0, sigma^2) elementwise noise."""
    orig_shape = point_set.shape
    orig_dtype = point_set.dtype
    total = int(point_set.size)
    if total == 0:
        return point_set

    # The op is elementwise, so we are free to pick the densest 2-D view that
    # needs NO padding copy: (8, total/8) when possible, else (4|2|1, ...).
    sub = next(k for k in (8, 4, 2, 1) if total % k == 0)
    cols = total // sub
    x2d = point_set.reshape(sub, cols)          # layout-trivial, zero-copy

    itemsize = jnp.dtype(orig_dtype).itemsize
    if tile_lanes is None:
        # ~2 MiB blocks; in+out double-buffers ~= 4x block, safe on v5e too.
        tile_lanes = max(128, (max_block_bytes // (max(sub, 8) * itemsize)) // 128 * 128)
    if cols > 128:
        # Guarantee >= 2 grid steps so v7x's two TensorCores both get work.
        tile_lanes = min(tile_lanes, _round_up(pl.cdiv(cols, 2), 128))
    tile_lanes = int(min(tile_lanes, _round_up(cols, 128)))
    grid = (pl.cdiv(cols, tile_lanes),)         # ragged last block is masked

    sigma_arr = jnp.asarray([sigma], dtype=jnp.float32)
    block_spec = pl.BlockSpec((sub, tile_lanes), lambda i: (0, i))
    smem_spec = pl.BlockSpec(memory_space=pltpu.MemorySpace.SMEM)
    compiler_params = pltpu.CompilerParams(dimension_semantics=("parallel",))
    cost = pl.CostEstimate(flops=2 * total,
                           transcendentals=total,
                           bytes_accessed=2 * total * itemsize)

    if jax.default_backend() == "tpu":
        # In-kernel hardware PRNG: HBM traffic is exactly read-x + write-out.
        seed_arr = jnp.asarray([seed], dtype=jnp.int32)
        out2d = pl.pallas_call(
            _translate_kernel_hwprng,
            out_shape=jax.ShapeDtypeStruct((sub, cols), orig_dtype),
            grid=grid,
            in_specs=[smem_spec, smem_spec, block_spec],
            out_specs=block_spec,
            input_output_aliases={2: 0},        # read-modify-write in place when donated
            compiler_params=compiler_params,
            cost_estimate=cost,
        )(seed_arr, sigma_arr, x2d)
    else:
        # TPU PRNG primitives have no CPU/interpret lowering -> draw noise with
        # jax.random and fuse only the add in the kernel (perf irrelevant here).
        noise = jax.random.normal(jax.random.PRNGKey(seed), (sub, cols), jnp.float32)
        out2d = pl.pallas_call(
            _translate_kernel_addnoise,
            out_shape=jax.ShapeDtypeStruct((sub, cols), orig_dtype),
            grid=grid,
            in_specs=[smem_spec, block_spec, block_spec],
            out_specs=block_spec,
            compiler_params=compiler_params,
            cost_estimate=cost,
        )(sigma_arr, x2d, noise)

    return out2d.reshape(orig_shape)


if __name__ == "__main__":
    key = jax.random.PRNGKey(0)

    sigma = 0.02       # module hyperparameter (std-dev of the translation noise)
    seed = 1234        # forward-time randomness
    n_points = 2000    # ragged vs. the 128-lane tile; total = 6000 -> dense (8, 750) view

    # Same layout as the PyTorch module: [n_points, 3].
    point_set = jax.random.normal(key, (n_points, 3), dtype=jnp.float32)

    out = jax.block_until_ready(random_translate_3d(point_set, sigma, seed))
    assert out.shape == point_set.shape and out.dtype == point_set.dtype

    # The added noise must be ~ i.i.d. N(0, sigma^2): check moments.
    delta = out - point_set
    mean = float(jnp.mean(delta))
    std = float(jnp.std(delta))
    assert abs(mean) < 0.25 * sigma, f"noise mean off: {mean}"
    assert abs(std - sigma) < 0.15 * sigma, f"noise std off: {std}"

    # Same seed -> identical translation; different seed -> different noise.
    out2 = jax.block_until_ready(random_translate_3d(point_set, sigma, seed))
    assert bool(jnp.array_equal(out, out2))
    out3 = jax.block_until_ready(random_translate_3d(point_set, sigma, seed + 9999))
    assert not bool(jnp.array_equal(out, out3))

    print("KERNEL_OK")
</pallas_src>

<mosaic_0001>
module attributes {stable_mosaic.version = 11 : i64} {
  func.func @_translate_kernel_addnoise(%arg0: i32, %arg1: memref<1xf32, #tpu.memory_space<smem>>, %arg2: memref<8x384xf32, #tpu.memory_space<vmem>>, %arg3: memref<8x384xf32, #tpu.memory_space<vmem>>, %arg4: memref<8x384xf32, #tpu.memory_space<vmem>>) attributes {dimension_semantics = [#tpu.dimension_semantics<parallel>], iteration_bounds = array<i64: 2>, scalar_prefetch = 0 : i64, scratch_operands = 0 : i64, tpu.core_type = #tpu.core_type<tc>, window_params = [{transform_indices = @transform_0, window_bounds = array<i64: 1>}, {transform_indices = @transform_1, window_bounds = array<i64: 8, 384>}, {transform_indices = @transform_2, window_bounds = array<i64: 8, 384>}, {transform_indices = @transform_3, window_bounds = array<i64: 8, 384>}]} {
    %c0 = arith.constant 0 : index
    %c0_0 = arith.constant 0 : index
    %0 = vector.load %arg2[%c0, %c0_0] : memref<8x384xf32, #tpu.memory_space<vmem>>, vector<8x384xf32>
    %c0_1 = arith.constant 0 : index
    %1 = memref.load %arg1[%c0_1] : memref<1xf32, #tpu.memory_space<smem>>
    %c0_2 = arith.constant 0 : index
    %c0_3 = arith.constant 0 : index
    %2 = vector.load %arg3[%c0_2, %c0_3] : memref<8x384xf32, #tpu.memory_space<vmem>>, vector<8x384xf32>
    %3 = vector.broadcast %1 : f32 to vector<8x384xf32>
    %4 = arith.mulf %3, %2 : vector<8x384xf32>
    %5 = arith.addf %0, %4 : vector<8x384xf32>
    %c0_4 = arith.constant 0 : index
    %c0_5 = arith.constant 0 : index
    %6 = vector.load %arg4[%c0_4, %c0_5] : memref<8x384xf32, #tpu.memory_space<vmem>>, vector<8x384xf32>
    tpu.vector_store %arg4[%c0_4, %c0_5], %5 {strides = array<i32>} : memref<8x384xf32, #tpu.memory_space<vmem>>, vector<8x384xf32>,
    return
  }
  func.func @transform_0(%arg0: i32) -> i32 {
    %c0_i32 = arith.constant 0 : i32
    %c0_i32_0 = arith.constant 0 : i32
    return %c0_i32 : i32
  }
  func.func @transform_1(%arg0: i32) -> (i32, i32) {
    %c0_i32 = arith.constant 0 : i32
    %c0_i32_0 = arith.constant 0 : i32
    return %c0_i32, %arg0 : i32, i32
  }
  func.func @transform_2(%arg0: i32) -> (i32, i32) {
    %c0_i32 = arith.constant 0 : i32
    %c0_i32_0 = arith.constant 0 : i32
    return %c0_i32, %arg0 : i32, i32
  }
  func.func @transform_3(%arg0: i32) -> (i32, i32) {
    %c0_i32 = arith.constant 0 : i32
    %c0_i32_0 = arith.constant 0 : i32
    return %c0_i32, %arg0 : i32, i32
  }
}

</mosaic_0001>

<llo_original>
// kernel: tpu_custom_call.1
$region0: #{tpu_custom_call.1}
  #allocation0 [shape = 'u32[]', space=smem, size = 0x4, offset = 0x4, fixed_abs, tag = 'smem constant byte address 0x4 - core index']
  #allocation1 [shape = 'u32[144,128]{1,0:T(1,128)}', space=vmem, size = 0x12000, scoped, tag = 'internal scratch']
  #allocation2 [shape = 'f32[1]{0:T(128)S(6)}', space=smem, size = 0x200, scoped, tag = 'scoped memory for tpu_custom_call.1']
  %s0 = inlined_call_operand.<no memory space> [shape: f32[1], index: 0, kind: input, shape index: {}]
  %s1 = inlined_call_operand.hbm [shape: f32[8,750], index: 1, kind: input, shape index: {}]
  %s2 = inlined_call_operand.hbm [shape: f32[8,750], index: 2, kind: input, shape index: {}]
  %s3 = inlined_call_operand.hbm [shape: f32[8,750], index: 3, kind: output, shape index: {}]
  %s4 = sld [smem:[#allocation0]]
  $region53: #{tpu_custom_call.1} parent=0
    _
  %s6 = ssub.s32 1, %s4
  %s7 = scalar_select 0, %s6, %s4
  %8 = sst [smem:[#allocation2]] %s0
  $region1: #{tpu_custom_call.1} parent=0
    #allocation3 [shape = 'u8[24576]{0}', space=vmem, size = 0x6000, scoped, tag = 'input window, operand 1']
    #allocation4 [shape = 's32[2]{0}', space=sflag, size = 0x8, scoped, tag = 'scoped memory for tpu_custom_call.1']
    #allocation5 [shape = 's32[2]{0}', space=sflag, size = 0x8, scoped, tag = 'scoped memory for tpu_custom_call.1']
    #allocation6 [shape = 'u8[24576]{0}', space=vmem, size = 0x6000, scoped, tag = 'input window, operand 2']
    #allocation7 [shape = 's32[2]{0}', space=sflag, size = 0x8, scoped, tag = 'scoped memory for tpu_custom_call.1']
    #allocation8 [shape = 'u8[24576]{0}', space=vmem, size = 0x6000, scoped, tag = 'output window, operand 0']
    %9 = vsyncpa [#allocation4], 0
    %s10 = scalar_lea.sflag [#allocation4], 1
    %11 = vsyncpa %s10, 0
    %12 = vsyncpa [#allocation7], 0
    %s13 = scalar_lea.sflag [#allocation7], 1
    %14 = vsyncpa %s13, 0
    %15 = vsyncpa [#allocation5], 0
    %s16 = scalar_lea.sflag [#allocation5], 1
    %17 = vsyncpa %s16, 0
    loop: start=0, step=1, limit=4
    $region2: #{tpu_custom_call.1} parent=1 // loop_pre_header
      _
    $region3: #{tpu_custom_call.1} parent=1 // loop_header
      %s19 = sphi 0, %s23
      %p20 = scmp.ge.s32.totalorder %s19, 4
      %s27 = sphi 0, %s27
      %s29 = sphi 0, %s27
      %s30 = sphi 0, %s29
      %s44 = sphi 0, %s30
      %s50 = sphi 0, %s52
      %s53 = sphi 0, %s50
      %s54 = sphi 0, %s53
      %s70 = sphi 0, %s54
      %s76 = sphi 0, %s78
      %s79 = sphi 0, %s76
      %s80 = sphi 0, %s79
      %s96 = sphi 0, %s80
      %s102 = sphi 0, %s104
      %s105 = sphi 0, %s102
      %s106 = sphi 0, %s105
      %s122 = sphi 0, %s106
    $region4: #{tpu_custom_call.1} parent=1 // loop_header_branch
      %22 = sbr.rel (%p20) target = $region8
    $region5: #{tpu_custom_call.1} parent=1 // loop_body
      %s24 = ssub.s32 %s19, 1
      %s25 = ssub.s32 %s19, 2
      %s26 = sadd.s32 %s19, 1
      %s28 = sadd.s32 %s27, 1
      %p31 = scmp.eq.s32.totalorder %s19, 1
      %p32 = scmp.ne.s32.totalorder %s27, %s29
      %p33 = scmp.eq.s32.totalorder %s19, 0
      %p34 = por %p32, %p33
      %p35 = scmp.ne.s32.totalorder %s27, %s29
      %p36 = scmp.eq.s32.totalorder %s24, 1
      %p37 = por %p35, %p36
      %p38 = scmp.ne.s32.totalorder %s29, %s30
      %p39 = scmp.eq.s32.totalorder %s24, 0
      %p40 = por %p38, %p39
      %p41 = scmp.ne.s32.totalorder %s29, %s30
      %p42 = scmp.eq.s32.totalorder %s25, 1
      %p43 = por %p41, %p42
      %p45 = scmp.ne.s32.totalorder %s30, %s44
      %p46 = scmp.eq.s32.totalorder %s25, 0
      %p47 = por %p45, %p46
      %s48 = ssub.s32 %s19, %s26
      %p49 = scmp.eq.s32.totalorder %s48, 0
      %s51 = sadd.s32 %s50, 1
      %s52 = scalar_select %p49, %s50, %s51
      %p55 = pneg %p49
      %p56 = scmp.eq.s32.totalorder %s19, 1
      %p57 = por %p55, %p56
      %p58 = scmp.ne.s32.totalorder %s50, %s53
      %p59 = scmp.eq.s32.totalorder %s19, 0
      %p60 = por %p58, %p59
      %p61 = scmp.ne.s32.totalorder %s50, %s53
      %p62 = scmp.eq.s32.totalorder %s24, 1
      %p63 = por %p61, %p62
      %p64 = scmp.ne.s32.totalorder %s53, %s54
      %p65 = scmp.eq.s32.totalorder %s24, 0
      %p66 = por %p64, %p65
      %p67 = scmp.ne.s32.totalorder %s53, %s54
      %p68 = scmp.eq.s32.totalorder %s25, 1
      %p69 = por %p67, %p68
      %p71 = scmp.ne.s32.totalorder %s54, %s70
      %p72 = scmp.eq.s32.totalorder %s25, 0
      %p73 = por %p71, %p72
      %s74 = ssub.s32 %s19, %s26
      %p75 = scmp.eq.s32.totalorder %s74, 0
      %s77 = sadd.s32 %s76, 1
      %s78 = scalar_select %p75, %s76, %s77
      %p81 = pneg %p75
      %p82 = scmp.eq.s32.totalorder %s19, 1
      %p83 = por %p81, %p82
      %p84 = scmp.ne.s32.totalorder %s76, %s79
      %p85 = scmp.eq.s32.totalorder %s19, 0
      %p86 = por %p84, %p85
      %p87 = scmp.ne.s32.totalorder %s76, %s79
      %p88 = scmp.eq.s32.totalorder %s24, 1
      %p89 = por %p87, %p88
      %p90 = scmp.ne.s32.totalorder %s79, %s80
      %p91 = scmp.eq.s32.totalorder %s24, 0
      %p92 = por %p90, %p91
      %p93 = scmp.ne.s32.totalorder %s79, %s80
      %p94 = scmp.eq.s32.totalorder %s25, 1
      %p95 = por %p93, %p94
      %p97 = scmp.ne.s32.totalorder %s80, %s96
      %p98 = scmp.eq.s32.totalorder %s25, 0
      %p99 = por %p97, %p98
      %s100 = ssub.s32 %s19, %s26
      %p101 = scmp.eq.s32.totalorder %s100, 0
      %s103 = sadd.s32 %s102, 1
      %s104 = scalar_select %p101, %s102, %s103
      %p107 = pneg %p101
      %p108 = scmp.eq.s32.totalorder %s19, 1
      %p109 = por %p107, %p108
      %p110 = scmp.ne.s32.totalorder %s102, %s105
      %p111 = scmp.eq.s32.totalorder %s19, 0
      %p112 = por %p110, %p111
      %p113 = scmp.ne.s32.totalorder %s102, %s105
      %p114 = scmp.eq.s32.totalorder %s24, 1
      %p115 = por %p113, %p114
      %p116 = scmp.ne.s32.totalorder %s105, %s106
      %p117 = scmp.eq.s32.totalorder %s24, 0
      %p118 = por %p116, %p117
      %p119 = scmp.ne.s32.totalorder %s105, %s106
      %p120 = scmp.eq.s32.totalorder %s25, 1
      %p121 = por %p119, %p120
      %p123 = scmp.ne.s32.totalorder %s106, %s122
      %p124 = scmp.eq.s32.totalorder %s25, 0
      %p125 = por %p123, %p124
      %p126 = scmp.le.s32.totalorder 1, %s19
      %p127 = scmp.lt.s32.totalorder %s19, 3
      %p128 = pnand %p126, %p127
      %p129 = pneg %p128
      // Predicated region
      $region9: #{tpu_custom_call.1} parent=5 // pred_check
        _
      $region10: #{tpu_custom_call.1} parent=5 // pred_check_branch
        %131 = sbr.rel (%p128) target = $region12
      $region11: #{tpu_custom_call.1} parent=5 // pred_region
        %s132 = ssub.s32 %s19, 1
        // Predicated region
        $region13: #{tpu_custom_call.1} parent=11 // pred_check
          %p133 = pneg %p40
        $region14: #{tpu_custom_call.1} parent=11 // pred_check_branch
          %135 = sbr.rel (%p133) target = $region16
        $region15: #{tpu_custom_call.1} parent=11 // pred_region
          _
        $region16: #{tpu_custom_call.1} parent=11 // pred_fallthru
          _
      $region12: #{tpu_custom_call.1} parent=5 // pred_fallthru
        _
      %p136 = scmp.lt.s32.totalorder %s19, 2
      // Predicated region
      $region17: #{tpu_custom_call.1} parent=5 // pred_check
        %p137 = pneg %p136
      $region18: #{tpu_custom_call.1} parent=5 // pred_check_branch
        %139 = sbr.rel (%p137) target = $region20
      $region19: #{tpu_custom_call.1} parent=5 // pred_region
        // Predicated region
        $region21: #{tpu_custom_call.1} parent=19 // pred_check
          %p140 = pneg %p60
        $region22: #{tpu_custom_call.1} parent=19 // pred_check_branch
          %142 = sbr.rel (%p140) target = $region24
        $region23: #{tpu_custom_call.1} parent=19 // pred_region
          %s143 = sand.u32 %s50, 1
          %s144 = scalar_lea.sflag [#allocation4], %s143
          %s145 = sand.u32 %s50, 1
          %s146 = smul.addr %s145, 24
          %s147 = scalar_lea.vmem [#allocation3], %s146
          %s148 = smul.u32 3, %s19
          %s150 = ssub.s32 384, 384
          %151 = vsyncadd %s144, %s150
          %s152 = smul.addr %s148, 128
          %s153 = scalar_lea.hbm %s1, %s152
          %s155 = sshll.u32 %s147, 4
          %s156 = int_to_ptr.vmem [resolvable:$true] %s155
          %158 = dma.hbm_to_vmem [thread:$0]  %s153, 384, %s156, %s144
        $region24: #{tpu_custom_call.1} parent=19 // pred_fallthru
          _
        // Predicated region
        $region25: #{tpu_custom_call.1} parent=19 // pred_check
          %p159 = pneg %p86
        $region26: #{tpu_custom_call.1} parent=19 // pred_check_branch
          %161 = sbr.rel (%p159) target = $region28
        $region27: #{tpu_custom_call.1} parent=19 // pred_region
          %s162 = sand.u32 %s76, 1
          %s163 = scalar_lea.sflag [#allocation7], %s162
          %s164 = sand.u32 %s76, 1
          %s165 = smul.addr %s164, 24
          %s166 = scalar_lea.vmem [#allocation6], %s165
          %s167 = smul.u32 3, %s19
          %s169 = ssub.s32 384, 384
          %170 = vsyncadd %s163, %s169
          %s171 = smul.addr %s167, 128
          %s172 = scalar_lea.hbm %s2, %s171
          %s174 = sshll.u32 %s166, 4
          %s175 = int_to_ptr.vmem [resolvable:$true] %s174
          %177 = dma.hbm_to_vmem [thread:$0]  %s172, 384, %s175, %s163
        $region28: #{tpu_custom_call.1} parent=19 // pred_fallthru
          _
      $region20: #{tpu_custom_call.1} parent=5 // pred_fallthru
        _
      %p178 = scmp.le.s32.totalorder 1, %s19
      %p179 = scmp.lt.s32.totalorder %s19, 3
      %p180 = pnand %p178, %p179
      %p181 = pneg %p180
      // Predicated region
      $region29: #{tpu_custom_call.1} parent=5 // pred_check
        _
      $region30: #{tpu_custom_call.1} parent=5 // pred_check_branch
        %183 = sbr.rel (%p180) target = $region32
      $region31: #{tpu_custom_call.1} parent=5 // pred_region
        %s184 = ssub.s32 %s19, 1
        %s185 = sand.u32 %s53, 1
        %s186 = scalar_lea.sflag [#allocation4], %s185
        %s187 = sand.u32 %s53, 1
        %s188 = smul.addr %s187, 24
        %s189 = scalar_lea.vmem [#allocation3], %s188
        // Predicated region
        $region33: #{tpu_custom_call.1} parent=31 // pred_check
          %p190 = pneg %p66
        $region34: #{tpu_custom_call.1} parent=31 // pred_check_branch
          %192 = sbr.rel (%p190) target = $region36
        $region35: #{tpu_custom_call.1} parent=31 // pred_region
          %193 = dma.done %s186, 384
        $region36: #{tpu_custom_call.1} parent=31 // pred_fallthru
          _
        %s194 = sand.u32 %s79, 1
        %s195 = scalar_lea.sflag [#allocation7], %s194
        %s196 = sand.u32 %s79, 1
        %s197 = smul.addr %s196, 24
        %s198 = scalar_lea.vmem [#allocation6], %s197
        // Predicated region
        $region37: #{tpu_custom_call.1} parent=31 // pred_check
          %p199 = pneg %p92
        $region38: #{tpu_custom_call.1} parent=31 // pred_check_branch
          %201 = sbr.rel (%p199) target = $region40
        $region39: #{tpu_custom_call.1} parent=31 // pred_region
          %202 = dma.done %s195, 384
        $region40: #{tpu_custom_call.1} parent=31 // pred_fallthru
          _
        %p203 = pneg %p40
        %p204 = pneg %p37
        %s205 = sand.u32 %s53, 1
        %s206 = scalar_lea.sflag [#allocation4], %s205
        %s207 = sand.u32 %s53, 1
        %s208 = smul.addr %s207, 24
        %s209 = scalar_lea.vmem [#allocation3], %s208
        %p210 = pneg %p66
        %p211 = pneg %p63
        %s212 = sand.u32 %s79, 1
        %s213 = scalar_lea.sflag [#allocation7], %s212
        %s214 = sand.u32 %s79, 1
        %s215 = smul.addr %s214, 24
        %s216 = scalar_lea.vmem [#allocation6], %s215
        %p217 = pneg %p92
        %p218 = pneg %p89
        %p219 = pneg %p118
        %p220 = pneg %p115
        %s221 = sand.u32 %s105, 1
        %s222 = scalar_lea.sflag [#allocation5], %s221
        %s223 = sand.u32 %s105, 1
        %s224 = smul.addr %s223, 24
        %s225 = scalar_lea.vmem [#allocation8], %s224
        %s226 = smul.u32 3, %s24
        %s227 = smul.u32 3, %s24
        %s228 = smul.u32 3, %s24
        %v229 = vld [vmem:[%s189] sm:$0xff]
        %v230 = vld [vmem:[%s189 + $0x8] sm:$0xff]
        %v231 = vld [vmem:[%s189 + $0x10] sm:$0xff]
        %s232 = sld [smem:[#allocation2]]
        %v233 = vld [vmem:[%s198] sm:$0xff]
        %v234 = vld [vmem:[%s198 + $0x8] sm:$0xff]
        %v235 = vld [vmem:[%s198 + $0x10] sm:$0xff]
        %v236 = vstv %s232
        %v237 = vmul.f32 %v236, %v233
        %v238 = vmul.f32 %v236, %v234
        %v239 = vmul.f32 %v236, %v235
        %v240 = vadd.f32 %v229, %v237
        %v241 = vadd.f32 %v230, %v238
        %v242 = vadd.f32 %v231, %v239
        %243 = vst [vmem:[%s225] sm:$0xff] %v240
        %244 = vst [vmem:[%s225 + $0x8] sm:$0xff] %v241
        %245 = vst [vmem:[%s225 + $0x10] sm:$0xff] %v242
        %s246 = sand.u32 %s105, 1
        %s247 = scalar_lea.sflag [#allocation5], %s246
        %s248 = sand.u32 %s105, 1
        %s249 = smul.addr %s248, 24
        %s250 = scalar_lea.vmem [#allocation8], %s249
        // Predicated region
        $region41: #{tpu_custom_call.1} parent=31 // pred_check
          %p251 = pneg %p115
        $region42: #{tpu_custom_call.1} parent=31 // pred_check_branch
          %253 = sbr.rel (%p251) target = $region44
        $region43: #{tpu_custom_call.1} parent=31 // pred_region
          %s254 = smul.u32 3, %s24
          %s256 = ssub.s32 384, 384
          %257 = vsyncadd %s247, %s256
          %s258 = smul.addr %s254, 128
          %s259 = scalar_lea.hbm %s3, %s258
          %s261 = sshll.u32 %s250, 4
          %s262 = int_to_ptr.vmem [resolvable:$true] %s261
          %264 = dma.vmem_to_hbm [thread:$0]  %s262, 384, %s259, %s247
        $region44: #{tpu_custom_call.1} parent=31 // pred_fallthru
          _
      $region32: #{tpu_custom_call.1} parent=5 // pred_fallthru
        _
      %p265 = scmp.le.s32.totalorder 2, %s19
      // Predicated region
      $region45: #{tpu_custom_call.1} parent=5 // pred_check
        %p266 = pneg %p265
      $region46: #{tpu_custom_call.1} parent=5 // pred_check_branch
        %268 = sbr.rel (%p266) target = $region48
      $region47: #{tpu_custom_call.1} parent=5 // pred_region
        %s269 = ssub.s32 %s19, 2
        // Predicated region
        $region49: #{tpu_custom_call.1} parent=47 // pred_check
          %p270 = pneg %p121
        $region50: #{tpu_custom_call.1} parent=47 // pred_check_branch
          %272 = sbr.rel (%p270) target = $region52
        $region51: #{tpu_custom_call.1} parent=47 // pred_region
          %s273 = sand.u32 %s106, 1
          %s274 = scalar_lea.sflag [#allocation5], %s273
          %s275 = sand.u32 %s106, 1
          %s276 = smul.addr %s275, 24
          %s277 = scalar_lea.vmem [#allocation8], %s276
          %278 = dma.done %s274, 384
        $region52: #{tpu_custom_call.1} parent=47 // pred_fallthru
          _
      $region48: #{tpu_custom_call.1} parent=5 // pred_fallthru
        _
    $region6: #{tpu_custom_call.1} parent=1 // loop_footer
      %s23 = sadd.s32 1, %s19
    $region7: #{tpu_custom_call.1} parent=1 // loop_footer_branch
      %18 = sbr.rel target = $region3
    $region8: #{tpu_custom_call.1} parent=1 // loop_exit
      _
    %279 = vsyncpa [#allocation4], 1
    %s280 = scalar_lea.sflag [#allocation4], 1
    %281 = vsyncpa %s280, 1
    %282 = vsyncpa [#allocation7], 1
    %s283 = scalar_lea.sflag [#allocation7], 1
    %284 = vsyncpa %s283, 1
    %285 = vsyncpa [#allocation5], 1
    %s286 = scalar_lea.sflag [#allocation5], 1
    %287 = vsyncpa %s286, 1

</llo_original>
